<compile_context>
chip_gen: v7x
topology: tpu7x:2x2x1
jax: 0.10.0
libtpu: 0.0.40
codegen_flags: <defaults>
</compile_context>

<pallas_src>
import functools

import jax
import jax.numpy as jnp
from jax.experimental import pallas as pl
from jax.experimental.pallas import tpu as pltpu


def _conv1d_bn_kernel(x_ref, w_ref, gamma_ref, beta_ref, out_ref,
                      *, n_batch, c_in, l_out, k, activation, eps):
    """One output-channel block of fused Conv1d + activation + BatchNorm1d.

    x_ref     : (N, C_in, L)     whole input, resident in VMEM (native NCL layout)
    w_ref     : (C_blk, K*C_in)  conv weight block, bf16, cols ordered (tap, in_ch)
    gamma_ref : (C_blk, 1)       BN weight (f32)
    beta_ref  : (C_blk, 1)       BN bias (f32)
    out_ref   : (N, C_blk, L)    output block (PyTorch NCL layout)
    """
    pad = k // 2
    nl = n_batch * l_out

    # Lane-pack the input: (N, C_in, L) -> (C_in, N*L).  Each x_ref[n] slice is
    # already a lane-aligned (C_in, L) tile, so this is vreg plumbing, not an
    # HBM relayout.
    x = jnp.concatenate([x_ref[n] for n in range(n_batch)], axis=1)

    # Per-lane position inside its own batch (0..L-1); identical pattern tiled
    # across batches (no modulo needed).
    pos1 = jax.lax.broadcasted_iota(jnp.int32, (c_in, l_out), 1)
    pos = jnp.concatenate([pos1] * n_batch, axis=1)               # (C_in, N*L)

    # im2col: tap t needs x shifted by s = t - pad along length, zero outside
    # [0, L) of each batch.  The roll is an XLU lane rotation; lanes that wrap
    # across a batch boundary are exactly the masked (out-of-range) ones.
    # Taps are cast to bf16 so the K-times-duplicated operand is half-size and
    # MXU-native.
    taps = []
    for t in range(k):
        s = t - pad
        if s == 0:
            tap = x
        else:
            rolled = pltpu.roll(x, (-s) % nl, 1)                  # res[l] = x[l+s]
            valid = jnp.logical_and(pos + s >= 0, pos + s < l_out)
            tap = jnp.where(valid, rolled, 0.0)
        taps.append(tap.astype(jnp.bfloat16))
    im2col = jnp.concatenate(taps, axis=0)                        # (K*C_in, N*L) bf16
    # TODO(synk): for production C_in >= 128, drop the materialized im2col and
    # issue K accumulating matmuls instead (v7x MRB supports in-place acc).

    # Single MXU matmul covering all taps and all batches; f32 accumulation.
    y = jnp.dot(w_ref[...], im2col, preferred_element_type=jnp.float32)
    if activation is not None:
        y = activation(y)                                         # (C_blk, N*L) f32

    # BatchNorm1d (training mode): biased per-channel stats over (N, L) == lanes,
    # computed in one pass, then folded into a single per-channel scale/shift.
    inv_nl = 1.0 / nl
    mean = jnp.sum(y, axis=1, keepdims=True) * inv_nl             # (C_blk, 1)
    ex2 = jnp.sum(y * y, axis=1, keepdims=True) * inv_nl
    var = ex2 - mean * mean                                       # biased var
    scale = gamma_ref[...] * jax.lax.rsqrt(var + eps)             # (C_blk, 1)
    shift = beta_ref[...] - mean * scale                          # (C_blk, 1)
    ynorm = (y * scale + shift).astype(out_ref.dtype)             # one mul+add+cast

    # Lane-aligned per-batch stores back to NCL layout (unmasked vst when
    # L is a multiple of 128; the slice starts are multiples of 128).
    for n in range(n_batch):
        out_ref[n] = ynorm[:, n * l_out:(n + 1) * l_out]


def conv1d_bn(x, w, gamma, beta, *, k, activation=None, eps=1e-5,
              c_block=None):
    """x: (N, C_in, L) f32, w: (C_out, C_in, K), gamma/beta: (C_out,)."""
    n_batch, c_in, length = x.shape
    c_out = w.shape[0]
    assert k % 2 == 1, "kernel assumes odd k (same-length 'same' conv)"
    l_out = length                      # stride 1, pad k//2, odd k -> same length
    assert length % 128 == 0, (
        "L must be a multiple of 128 for lane-dense (unmasked) output stores")
    # TODO(synk): add a padded/masked-store path for general L.

    # Weight columns ordered (tap, in_channel) to match the im2col row order;
    # bf16 for the MXU.  Tiny relayout (C_out*K*C_in elements), unlike x.
    w2 = jnp.transpose(w, (0, 2, 1)).reshape(c_out, k * c_in).astype(jnp.bfloat16)
    gamma2 = gamma.reshape(c_out, 1).astype(jnp.float32)
    beta2 = beta.reshape(c_out, 1).astype(jnp.float32)

    if c_block is None:
        c_block = min(c_out, 256)       # MXU output tile on v6e/v7x
        # Prefer >= 2 grid steps (megacore sharding on v7x, writeback overlap)
        # when that keeps 8-sublane alignment of the channel blocks.
        if c_out // c_block < 2 and c_out % 16 == 0:
            c_block = c_out // 2
    assert c_out % c_block == 0
    assert c_block % 8 == 0 or c_block == c_out

    # Trace-time VMEM budget (v7x-safe: <= 24 MiB resident per grid step).
    nl = n_batch * l_out
    out_bytes = jnp.dtype(x.dtype).itemsize
    vmem_bytes = (
        n_batch * c_in * length * 4                 # x, whole-array VMEM (1 buffer)
        + c_in * nl * 4                             # in-kernel lane-packed copy of x
        + k * c_in * nl * 2                         # bf16 im2col
        + c_block * nl * 4                          # f32 conv+activation result
        + c_block * nl * out_bytes                  # normalized / cast result
        + 2 * c_block * k * c_in * 2                # w block (double-buffered, bf16)
        + 2 * n_batch * c_block * l_out * out_bytes # output block (double-buffered)
        + 4 * c_block * 4)                          # gamma/beta blocks
    assert vmem_bytes <= 24 * 1024 * 1024, (
        f"resident VMEM estimate {vmem_bytes / 2**20:.1f} MiB exceeds the 24 MiB "
        "budget (v7x-safe); implement the NL-tiled two-pass BN before scaling up")
    # TODO(synk): for large N*L, tile the lane axis with an inner 'arbitrary'
    # grid axis + (C_blk, 1) sum/sumsq VMEM scratch (two-pass BN: reduce, then
    # normalize) and re-budget for v7x's 64 MiB VMEM.

    kernel = functools.partial(
        _conv1d_bn_kernel,
        n_batch=n_batch, c_in=c_in, l_out=l_out, k=k,
        activation=activation, eps=eps)

    return pl.pallas_call(
        kernel,
        out_shape=jax.ShapeDtypeStruct((n_batch, c_out, l_out), x.dtype),
        grid=(c_out // c_block,),
        in_specs=[
            # x in native NCL layout, whole array resident in VMEM once:
            # constant across grid steps -> no double buffering of the largest
            # operand, and no wrapper-side transpose/HBM round trip.
            pl.BlockSpec(memory_space=pltpu.MemorySpace.VMEM),
            pl.BlockSpec((c_block, k * c_in), lambda c: (c, 0)),
            pl.BlockSpec((c_block, 1), lambda c: (c, 0)),
            pl.BlockSpec((c_block, 1), lambda c: (c, 0)),
        ],
        out_specs=pl.BlockSpec((n_batch, c_block, l_out), lambda c: (0, c, 0)),
        compiler_params=pltpu.CompilerParams(
            dimension_semantics=("parallel",),   # per-channel BN -> blocks independent
            vmem_limit_bytes=32 * 1024 * 1024),
    )(x, w2, gamma2, beta2)


def _reference(x, w, gamma, beta, *, k, activation=None, eps=1e-5):
    pad = k // 2
    y = jax.lax.conv_general_dilated(
        x, w, window_strides=(1,), padding=[(pad, pad)],
        dimension_numbers=("NCH", "OIH", "NCH"),
        precision=jax.lax.Precision.HIGHEST)
    if activation is not None:
        y = activation(y)
    mean = jnp.mean(y, axis=(0, 2), keepdims=True)
    var = jnp.var(y, axis=(0, 2), keepdims=True)        # biased, like BN training
    c_out = w.shape[0]
    return (gamma.reshape(1, c_out, 1) * (y - mean) * jax.lax.rsqrt(var + eps)
            + beta.reshape(1, c_out, 1))


if __name__ == "__main__":
    # Module config: Conv1DBN(in_channel=8, out_channel=16, k=3, bias=False,
    #                         activation=ReLU); N=2, L=128.
    # C_OUT=16 -> c_block=8 -> a 2-step "parallel" channel grid (exercises the
    # multi-step pipeline / megacore path while staying small).
    N, C_IN, C_OUT, L, K = 2, 8, 16, 128, 3
    activation = jax.nn.relu

    key = jax.random.PRNGKey(0)
    kx, kw = jax.random.split(key)
    x = jax.random.normal(kx, (N, C_IN, L), dtype=jnp.float32)
    # Deterministic conv weight (kaiming-uniform-ish scale); no conv bias.
    bound = 1.0 / (C_IN * K) ** 0.5
    w = jax.random.uniform(kw, (C_OUT, C_IN, K), dtype=jnp.float32,
                           minval=-bound, maxval=bound)
    # BatchNorm1d default init: gamma = 1, beta = 0.
    gamma = jnp.ones((C_OUT,), jnp.float32)
    beta = jnp.zeros((C_OUT,), jnp.float32)

    out = conv1d_bn(x, w, gamma, beta, k=K, activation=activation)
    out = jax.block_until_ready(out)

    ref = _reference(x, w, gamma, beta, k=K, activation=activation)
    assert out.shape == (N, C_OUT, L)
    # bf16 MXU operands (f32 accumulation) vs. f32 HIGHEST-precision reference.
    assert jnp.allclose(out, ref, atol=3e-2, rtol=3e-2), (
        float(jnp.max(jnp.abs(out - ref))))

    print("KERNEL_OK")
</pallas_src>

<mosaic_0001>
module attributes {stable_mosaic.version = 11 : i64} {
  func.func @_conv1d_bn_kernel(%arg0: i32, %arg1: memref<2x8x128xf32, #tpu.memory_space<vmem>>, %arg2: memref<8x24xbf16, #tpu.memory_space<vmem>>, %arg3: memref<8x1xf32, #tpu.memory_space<vmem>>, %arg4: memref<8x1xf32, #tpu.memory_space<vmem>>, %arg5: memref<2x8x128xf32, #tpu.memory_space<vmem>>) attributes {dimension_semantics = [#tpu.dimension_semantics<parallel>], iteration_bounds = array<i64: 2>, scalar_prefetch = 0 : i64, scratch_operands = 0 : i64, tpu.core_type = #tpu.core_type<tc>, window_params = [{pipeline_mode = #tpu.pipeline_mode<synchronous>, transform_indices = @transform_0, window_bounds = array<i64: 2, 8, 128>}, {transform_indices = @transform_1, window_bounds = array<i64: 8, 24>}, {transform_indices = @transform_2, window_bounds = array<i64: 8, 1>}, {transform_indices = @transform_3, window_bounds = array<i64: 8, 1>}, {transform_indices = @transform_4, window_bounds = array<i64: 2, 8, 128>}]} {
    %c0 = arith.constant 0 : index
    %c0_0 = arith.constant 0 : index
    %c0_1 = arith.constant 0 : index
    %0 = vector.load %arg1[%c0, %c0_0, %c0_1] : memref<2x8x128xf32, #tpu.memory_space<vmem>>, vector<1x8x128xf32>
    %1 = vector.shape_cast %0 : vector<1x8x128xf32> to vector<8x128xf32>
    %c1 = arith.constant 1 : index
    %c0_2 = arith.constant 0 : index
    %c0_3 = arith.constant 0 : index
    %2 = vector.load %arg1[%c1, %c0_2, %c0_3] : memref<2x8x128xf32, #tpu.memory_space<vmem>>, vector<1x8x128xf32>
    %3 = vector.shape_cast %2 : vector<1x8x128xf32> to vector<8x128xf32>
    %4 = tpu.concatenate %1, %3 in 1 : vector<8x128xf32>, vector<8x128xf32> -> vector<8x256xf32>
    %5 = tpu.iota {dimensions = array<i32: 1>} : vector<8x128xi32>
    %6 = tpu.concatenate %5, %5 in 1 : vector<8x128xi32>, vector<8x128xi32> -> vector<8x256xi32>
    %c1_i32 = arith.constant 1 : i32
    %7 = tpu.dynamic_rotate %4 by %c1_i32 dim 1 : vector<8x256xf32>, i32 -> vector<8x256xf32>
    %c-1_i32 = arith.constant -1 : i32
    %8 = vector.broadcast %c-1_i32 : i32 to vector<8x256xi32>
    %9 = arith.addi %6, %8 : vector<8x256xi32>
    %c0_i32 = arith.constant 0 : i32
    %10 = vector.broadcast %c0_i32 : i32 to vector<8x256xi32>
    %11 = arith.cmpi sge, %9, %10 : vector<8x256xi32>
    %c-1_i32_4 = arith.constant -1 : i32
    %12 = vector.broadcast %c-1_i32_4 : i32 to vector<8x256xi32>
    %13 = arith.addi %6, %12 : vector<8x256xi32>
    %c128_i32 = arith.constant 128 : i32
    %14 = vector.broadcast %c128_i32 : i32 to vector<8x256xi32>
    %15 = arith.cmpi slt, %13, %14 : vector<8x256xi32>
    %16 = arith.andi %11, %15 : vector<8x256xi1>
    %cst = arith.constant 0.000000e+00 : f32
    %17 = vector.broadcast %cst : f32 to vector<8x256xf32>
    %18 = arith.select %16, %7, %17 : vector<8x256xi1>, vector<8x256xf32>
    %19 = arith.truncf %18 : vector<8x256xf32> to vector<8x256xbf16>
    %20 = arith.truncf %4 : vector<8x256xf32> to vector<8x256xbf16>
    %c255_i32 = arith.constant 255 : i32
    %21 = tpu.dynamic_rotate %4 by %c255_i32 dim 1 : vector<8x256xf32>, i32 -> vector<8x256xf32>
    %c1_i32_5 = arith.constant 1 : i32
    %22 = vector.broadcast %c1_i32_5 : i32 to vector<8x256xi32>
    %23 = arith.addi %6, %22 : vector<8x256xi32>
    %c0_i32_6 = arith.constant 0 : i32
    %24 = vector.broadcast %c0_i32_6 : i32 to vector<8x256xi32>
    %25 = arith.cmpi sge, %23, %24 : vector<8x256xi32>
    %c1_i32_7 = arith.constant 1 : i32
    %26 = vector.broadcast %c1_i32_7 : i32 to vector<8x256xi32>
    %27 = arith.addi %6, %26 : vector<8x256xi32>
    %c128_i32_8 = arith.constant 128 : i32
    %28 = vector.broadcast %c128_i32_8 : i32 to vector<8x256xi32>
    %29 = arith.cmpi slt, %27, %28 : vector<8x256xi32>
    %30 = arith.andi %25, %29 : vector<8x256xi1>
    %cst_9 = arith.constant 0.000000e+00 : f32
    %31 = vector.broadcast %cst_9 : f32 to vector<8x256xf32>
    %32 = arith.select %30, %21, %31 : vector<8x256xi1>, vector<8x256xf32>
    %33 = arith.truncf %32 : vector<8x256xf32> to vector<8x256xbf16>
    %34 = tpu.concatenate %19, %20, %33 in 0 : vector<8x256xbf16>, vector<8x256xbf16>, vector<8x256xbf16> -> vector<24x256xbf16>
    %c0_10 = arith.constant 0 : index
    %c0_11 = arith.constant 0 : index
    %35 = vector.load %arg2[%c0_10, %c0_11] : memref<8x24xbf16, #tpu.memory_space<vmem>>, vector<8x24xbf16>
    %cst_12 = arith.constant dense<0.000000e+00> : vector<8x256xf32>
    %36 = tpu.matmul %35, %34, %cst_12 {dimension_numbers = #tpu.dot_dimension_numbers<[1], [0], [0], [1], [0, 0, 1, 1], [], []>} : vector<8x24xbf16>, vector<24x256xbf16>, vector<8x256xf32> -> vector<8x256xf32>
    %cst_13 = arith.constant 0.000000e+00 : f32
    %37 = vector.broadcast %cst_13 : f32 to vector<8x256xf32>
    %38 = arith.maximumf %36, %37 : vector<8x256xf32>
    %cst_14 = arith.constant dense<0.000000e+00> : vector<8xf32>
    %39 = vector.multi_reduction <add>, %38, %cst_14 [1] : vector<8x256xf32> to vector<8xf32>
    %40 = vector.shape_cast %39 : vector<8xf32> to vector<8x1xf32>
    %cst_15 = arith.constant 3.906250e-03 : f32
    %41 = vector.broadcast %cst_15 : f32 to vector<8x1xf32>
    %42 = arith.mulf %40, %41 : vector<8x1xf32>
    %43 = arith.mulf %38, %38 : vector<8x256xf32>
    %cst_16 = arith.constant dense<0.000000e+00> : vector<8xf32>
    %44 = vector.multi_reduction <add>, %43, %cst_16 [1] : vector<8x256xf32> to vector<8xf32>
    %45 = vector.shape_cast %44 : vector<8xf32> to vector<8x1xf32>
    %cst_17 = arith.constant 3.906250e-03 : f32
    %46 = vector.broadcast %cst_17 : f32 to vector<8x1xf32>
    %47 = arith.mulf %45, %46 : vector<8x1xf32>
    %48 = arith.mulf %42, %42 : vector<8x1xf32>
    %49 = arith.subf %47, %48 : vector<8x1xf32>
    %c0_18 = arith.constant 0 : index
    %c0_19 = arith.constant 0 : index
    %50 = vector.load %arg3[%c0_18, %c0_19] : memref<8x1xf32, #tpu.memory_space<vmem>>, vector<8x1xf32>
    %cst_20 = arith.constant 9.99999974E-6 : f32
    %51 = vector.broadcast %cst_20 : f32 to vector<8x1xf32>
    %52 = arith.addf %49, %51 : vector<8x1xf32>
    %53 = math.rsqrt %52 : vector<8x1xf32>
    %54 = arith.mulf %50, %53 : vector<8x1xf32>
    %c0_21 = arith.constant 0 : index
    %c0_22 = arith.constant 0 : index
    %55 = vector.load %arg4[%c0_21, %c0_22] : memref<8x1xf32, #tpu.memory_space<vmem>>, vector<8x1xf32>
    %56 = arith.mulf %42, %54 : vector<8x1xf32>
    %57 = arith.subf %55, %56 : vector<8x1xf32>
    %58 = vector.broadcast %54 : vector<8x1xf32> to vector<8x256xf32>
    %59 = arith.mulf %38, %58 : vector<8x256xf32>
    %60 = vector.broadcast %57 : vector<8x1xf32> to vector<8x256xf32>
    %61 = arith.addf %59, %60 : vector<8x256xf32>
    %62 = vector.extract_strided_slice %61 {offsets = [0, 0], sizes = [8, 128], strides = [1, 1]} : vector<8x256xf32> to vector<8x128xf32>
    %c0_23 = arith.constant 0 : index
    %c0_24 = arith.constant 0 : index
    %c0_25 = arith.constant 0 : index
    %63 = vector.load %arg5[%c0_23, %c0_24, %c0_25] : memref<2x8x128xf32, #tpu.memory_space<vmem>>, vector<1x8x128xf32>
    %64 = vector.shape_cast %63 : vector<1x8x128xf32> to vector<8x128xf32>
    %65 = vector.shape_cast %62 : vector<8x128xf32> to vector<1x8x128xf32>
    tpu.vector_store %arg5[%c0_23, %c0_24, %c0_25], %65 {strides = array<i32>} : memref<2x8x128xf32, #tpu.memory_space<vmem>>, vector<1x8x128xf32>,
    %66 = vector.extract_strided_slice %61 {offsets = [0, 128], sizes = [8, 128], strides = [1, 1]} : vector<8x256xf32> to vector<8x128xf32>
    %c1_26 = arith.constant 1 : index
    %c0_27 = arith.constant 0 : index
    %c0_28 = arith.constant 0 : index
    %67 = vector.load %arg5[%c1_26, %c0_27, %c0_28] : memref<2x8x128xf32, #tpu.memory_space<vmem>>, vector<1x8x128xf32>
    %68 = vector.shape_cast %67 : vector<1x8x128xf32> to vector<8x128xf32>
    %69 = vector.shape_cast %66 : vector<8x128xf32> to vector<1x8x128xf32>
    tpu.vector_store %arg5[%c1_26, %c0_27, %c0_28], %69 {strides = array<i32>} : memref<2x8x128xf32, #tpu.memory_space<vmem>>, vector<1x8x128xf32>,
    return
  }
  func.func @transform_0(%arg0: i32) -> (i32, i32, i32) {
    %c0_i32 = arith.constant 0 : i32
    %c0_i32_0 = arith.constant 0 : i32
    %c0_i32_1 = arith.constant 0 : i32
    %c0_i32_2 = arith.constant 0 : i32
    return %c0_i32, %c0_i32_0, %c0_i32_1 : i32, i32, i32
  }
  func.func @transform_1(%arg0: i32) -> (i32, i32) {
    %c0_i32 = arith.constant 0 : i32
    %c0_i32_0 = arith.constant 0 : i32
    return %arg0, %c0_i32 : i32, i32
  }
  func.func @transform_2(%arg0: i32) -> (i32, i32) {
    %c0_i32 = arith.constant 0 : i32
    %c0_i32_0 = arith.constant 0 : i32
    return %arg0, %c0_i32 : i32, i32
  }
  func.func @transform_3(%arg0: i32) -> (i32, i32) {
    %c0_i32 = arith.constant 0 : i32
    %c0_i32_0 = arith.constant 0 : i32
    return %arg0, %c0_i32 : i32, i32
  }
  func.func @transform_4(%arg0: i32) -> (i32, i32, i32) {
    %c0_i32 = arith.constant 0 : i32
    %c0_i32_0 = arith.constant 0 : i32
    %c0_i32_1 = arith.constant 0 : i32
    return %c0_i32, %arg0, %c0_i32_0 : i32, i32, i32
  }
}

</mosaic_0001>

<llo_original>
// kernel: tpu_custom_call.1
$region0: #{tpu_custom_call.1}
  #allocation0 [shape = 'u32[]', space=smem, size = 0x4, offset = 0x4, fixed_abs, tag = 'smem constant byte address 0x4 - core index']
  #allocation1 [shape = 'u32[144,128]{1,0:T(1,128)}', space=vmem, size = 0x12000, scoped, tag = 'internal scratch']
  %s0 = inlined_call_operand.vmem [shape: f32[2,8,128], index: 0, kind: input, shape index: {}]
  %s1 = inlined_call_operand.vmem [shape: bf16[16,24], index: 1, kind: input, shape index: {}]
  %s2 = inlined_call_operand.vmem [shape: f32[16,1], index: 2, kind: input, shape index: {}]
  %s3 = inlined_call_operand.vmem [shape: f32[16,1], index: 3, kind: input, shape index: {}]
  %s4 = inlined_call_operand.hbm [shape: f32[2,16,128], index: 4, kind: output, shape index: {}]
  %s5 = sld [smem:[#allocation0]]
  $region49: #{tpu_custom_call.1} parent=0
    _
  %s7 = ssub.s32 1, %s5
  %s8 = scalar_select 0, %s7, %s5
  $region1: #{tpu_custom_call.1} parent=0
    #allocation2 [shape = 'u8[16384]{0}', space=vmem, size = 0x4000, scoped, tag = 'output window, operand 0']
    #allocation3 [shape = 's32[2]{0}', space=sflag, size = 0x8, scoped, tag = 'scoped memory for tpu_custom_call.1']
    %9 = vsyncpa [#allocation3], 0
    %s10 = scalar_lea.sflag [#allocation3], 1
    %11 = vsyncpa %s10, 0
    loop: start=0, step=1, limit=4
    $region2: #{tpu_custom_call.1} parent=1 // loop_pre_header
      _
    $region3: #{tpu_custom_call.1} parent=1 // loop_header
      %s13 = sphi 0, %s17
      %p14 = scmp.ge.s32.totalorder %s13, 4
      %s21 = sphi 0, %s21
      %s23 = sphi 0, %s21
      %s24 = sphi 0, %s23
      %s38 = sphi 0, %s24
      %s44 = sphi 0, %s46
      %s47 = sphi 0, %s44
      %s48 = sphi 0, %s47
      %s64 = sphi 0, %s48
      %s70 = sphi 0, %s72
      %s73 = sphi 0, %s70
      %s74 = sphi 0, %s73
      %s90 = sphi 0, %s74
      %s96 = sphi 0, %s98
      %s99 = sphi 0, %s96
      %s100 = sphi 0, %s99
      %s116 = sphi 0, %s100
      %s122 = sphi 0, %s124
      %s125 = sphi 0, %s122
      %s126 = sphi 0, %s125
      %s142 = sphi 0, %s126
    $region4: #{tpu_custom_call.1} parent=1 // loop_header_branch
      %16 = sbr.rel (%p14) target = $region8
    $region5: #{tpu_custom_call.1} parent=1 // loop_body
      %s18 = ssub.s32 %s13, 1
      %s19 = ssub.s32 %s13, 2
      %s20 = sadd.s32 %s13, 1
      %s22 = sadd.s32 %s21, 1
      %p25 = scmp.eq.s32.totalorder %s13, 1
      %p26 = scmp.ne.s32.totalorder %s21, %s23
      %p27 = scmp.eq.s32.totalorder %s13, 0
      %p28 = por %p26, %p27
      %p29 = scmp.ne.s32.totalorder %s21, %s23
      %p30 = scmp.eq.s32.totalorder %s18, 1
      %p31 = por %p29, %p30
      %p32 = scmp.ne.s32.totalorder %s23, %s24
      %p33 = scmp.eq.s32.totalorder %s18, 0
      %p34 = por %p32, %p33
      %p35 = scmp.ne.s32.totalorder %s23, %s24
      %p36 = scmp.eq.s32.totalorder %s19, 1
      %p37 = por %p35, %p36
      %p39 = scmp.ne.s32.totalorder %s24, %s38
      %p40 = scmp.eq.s32.totalorder %s19, 0
      %p41 = por %p39, %p40
      %s42 = ssub.s32 %s13, %s20
      %p43 = scmp.eq.s32.totalorder %s42, 0
      %s45 = sadd.s32 %s44, 1
      %s46 = scalar_select %p43, %s44, %s45
      %p49 = pneg %p43
      %p50 = scmp.eq.s32.totalorder %s13, 1
      %p51 = por %p49, %p50
      %p52 = scmp.ne.s32.totalorder %s44, %s47
      %p53 = scmp.eq.s32.totalorder %s13, 0
      %p54 = por %p52, %p53
      %p55 = scmp.ne.s32.totalorder %s44, %s47
      %p56 = scmp.eq.s32.totalorder %s18, 1
      %p57 = por %p55, %p56
      %p58 = scmp.ne.s32.totalorder %s47, %s48
      %p59 = scmp.eq.s32.totalorder %s18, 0
      %p60 = por %p58, %p59
      %p61 = scmp.ne.s32.totalorder %s47, %s48
      %p62 = scmp.eq.s32.totalorder %s19, 1
      %p63 = por %p61, %p62
      %p65 = scmp.ne.s32.totalorder %s48, %s64
      %p66 = scmp.eq.s32.totalorder %s19, 0
      %p67 = por %p65, %p66
      %s68 = ssub.s32 %s13, %s20
      %p69 = scmp.eq.s32.totalorder %s68, 0
      %s71 = sadd.s32 %s70, 1
      %s72 = scalar_select %p69, %s70, %s71
      %p75 = pneg %p69
      %p76 = scmp.eq.s32.totalorder %s13, 1
      %p77 = por %p75, %p76
      %p78 = scmp.ne.s32.totalorder %s70, %s73
      %p79 = scmp.eq.s32.totalorder %s13, 0
      %p80 = por %p78, %p79
      %p81 = scmp.ne.s32.totalorder %s70, %s73
      %p82 = scmp.eq.s32.totalorder %s18, 1
      %p83 = por %p81, %p82
      %p84 = scmp.ne.s32.totalorder %s73, %s74
      %p85 = scmp.eq.s32.totalorder %s18, 0
      %p86 = por %p84, %p85
      %p87 = scmp.ne.s32.totalorder %s73, %s74
      %p88 = scmp.eq.s32.totalorder %s19, 1
      %p89 = por %p87, %p88
      %p91 = scmp.ne.s32.totalorder %s74, %s90
      %p92 = scmp.eq.s32.totalorder %s19, 0
      %p93 = por %p91, %p92
      %s94 = ssub.s32 %s13, %s20
      %p95 = scmp.eq.s32.totalorder %s94, 0
      %s97 = sadd.s32 %s96, 1
      %s98 = scalar_select %p95, %s96, %s97
      %p101 = pneg %p95
      %p102 = scmp.eq.s32.totalorder %s13, 1
      %p103 = por %p101, %p102
      %p104 = scmp.ne.s32.totalorder %s96, %s99
      %p105 = scmp.eq.s32.totalorder %s13, 0
      %p106 = por %p104, %p105
      %p107 = scmp.ne.s32.totalorder %s96, %s99
      %p108 = scmp.eq.s32.totalorder %s18, 1
      %p109 = por %p107, %p108
      %p110 = scmp.ne.s32.totalorder %s99, %s100
      %p111 = scmp.eq.s32.totalorder %s18, 0
      %p112 = por %p110, %p111
      %p113 = scmp.ne.s32.totalorder %s99, %s100
      %p114 = scmp.eq.s32.totalorder %s19, 1
      %p115 = por %p113, %p114
      %p117 = scmp.ne.s32.totalorder %s100, %s116
      %p118 = scmp.eq.s32.totalorder %s19, 0
      %p119 = por %p117, %p118
      %s120 = ssub.s32 %s13, %s20
      %p121 = scmp.eq.s32.totalorder %s120, 0
      %s123 = sadd.s32 %s122, 1
      %s124 = scalar_select %p121, %s122, %s123
      %p127 = pneg %p121
      %p128 = scmp.eq.s32.totalorder %s13, 1
      %p129 = por %p127, %p128
      %p130 = scmp.ne.s32.totalorder %s122, %s125
      %p131 = scmp.eq.s32.totalorder %s13, 0
      %p132 = por %p130, %p131
      %p133 = scmp.ne.s32.totalorder %s122, %s125
      %p134 = scmp.eq.s32.totalorder %s18, 1
      %p135 = por %p133, %p134
      %p136 = scmp.ne.s32.totalorder %s125, %s126
      %p137 = scmp.eq.s32.totalorder %s18, 0
      %p138 = por %p136, %p137
      %p139 = scmp.ne.s32.totalorder %s125, %s126
      %p140 = scmp.eq.s32.totalorder %s19, 1
      %p141 = por %p139, %p140
      %p143 = scmp.ne.s32.totalorder %s126, %s142
      %p144 = scmp.eq.s32.totalorder %s19, 0
      %p145 = por %p143, %p144
      %p146 = scmp.le.s32.totalorder 1, %s13
      %p147 = scmp.lt.s32.totalorder %s13, 3
      %p148 = pnand %p146, %p147
      %p149 = pneg %p148
      // Predicated region
      $region9: #{tpu_custom_call.1} parent=5 // pred_check
        _
      $region10: #{tpu_custom_call.1} parent=5 // pred_check_branch
        %151 = sbr.rel (%p148) target = $region12
      $region11: #{tpu_custom_call.1} parent=5 // pred_region
        %s152 = ssub.s32 %s13, 1
        // Predicated region
        $region13: #{tpu_custom_call.1} parent=11 // pred_check
          %p153 = pneg %p34
        $region14: #{tpu_custom_call.1} parent=11 // pred_check_branch
          %155 = sbr.rel (%p153) target = $region16
        $region15: #{tpu_custom_call.1} parent=11 // pred_region
          _
        $region16: #{tpu_custom_call.1} parent=11 // pred_fallthru
          _
      $region12: #{tpu_custom_call.1} parent=5 // pred_fallthru
        _
      %p156 = scmp.lt.s32.totalorder %s13, 2
      // Predicated region
      $region17: #{tpu_custom_call.1} parent=5 // pred_check
        %p157 = pneg %p156
      $region18: #{tpu_custom_call.1} parent=5 // pred_check_branch
        %159 = sbr.rel (%p157) target = $region20
      $region19: #{tpu_custom_call.1} parent=5 // pred_region
        // Predicated region
        $region21: #{tpu_custom_call.1} parent=19 // pred_check
          %p160 = pneg %p54
        $region22: #{tpu_custom_call.1} parent=19 // pred_check_branch
          %162 = sbr.rel (%p160) target = $region24
        $region23: #{tpu_custom_call.1} parent=19 // pred_region
          %p163 = scmp.lt.s32.totalorder %s13, 1
          %s164 = scalar_select %p163, %s13, 1
          %s165 = smul.addr %s164, 4
          %s166 = scalar_lea.vmem %s1, %s165
        $region24: #{tpu_custom_call.1} parent=19 // pred_fallthru
          _
        // Predicated region
        $region25: #{tpu_custom_call.1} parent=19 // pred_check
          %p167 = pneg %p80
        $region26: #{tpu_custom_call.1} parent=19 // pred_check_branch
          %169 = sbr.rel (%p167) target = $region28
        $region27: #{tpu_custom_call.1} parent=19 // pred_region
          %p170 = scmp.lt.s32.totalorder %s13, 1
          %s171 = scalar_select %p170, %s13, 1
          %s172 = smul.addr %s171, 8
          %s173 = scalar_lea.vmem %s2, %s172
        $region28: #{tpu_custom_call.1} parent=19 // pred_fallthru
          _
        // Predicated region
        $region29: #{tpu_custom_call.1} parent=19 // pred_check
          %p174 = pneg %p106
        $region30: #{tpu_custom_call.1} parent=19 // pred_check_branch
          %176 = sbr.rel (%p174) target = $region32
        $region31: #{tpu_custom_call.1} parent=19 // pred_region
          %p177 = scmp.lt.s32.totalorder %s13, 1
          %s178 = scalar_select %p177, %s13, 1
          %s179 = smul.addr %s178, 8
          %s180 = scalar_lea.vmem %s3, %s179
        $region32: #{tpu_custom_call.1} parent=19 // pred_fallthru
          _
      $region20: #{tpu_custom_call.1} parent=5 // pred_fallthru
        _
      %p181 = scmp.le.s32.totalorder 1, %s13
      %p182 = scmp.lt.s32.totalorder %s13, 3
      %p183 = pnand %p181, %p182
      %p184 = pneg %p183
      // Predicated region
      $region33: #{tpu_custom_call.1} parent=5 // pred_check
        _
      $region34: #{tpu_custom_call.1} parent=5 // pred_check_branch
        %186 = sbr.rel (%p183) target = $region36
      $region35: #{tpu_custom_call.1} parent=5 // pred_region
        %s187 = ssub.s32 %s13, 1
        %p188 = pneg %p34
        %p189 = pneg %p31
        %p190 = scmp.lt.s32.totalorder %s18, 1
        %s191 = scalar_select %p190, %s18, 1
        %s192 = smul.addr %s191, 4
        %s193 = scalar_lea.vmem %s1, %s192
        %p194 = pneg %p60
        %p195 = pneg %p57
        %p196 = scmp.lt.s32.totalorder %s18, 1
        %s197 = scalar_select %p196, %s18, 1
        %s198 = smul.addr %s197, 8
        %s199 = scalar_lea.vmem %s2, %s198
        %p200 = pneg %p86
        %p201 = pneg %p83
        %p202 = scmp.lt.s32.totalorder %s18, 1
        %s203 = scalar_select %p202, %s18, 1
        %s204 = smul.addr %s203, 8
        %s205 = scalar_lea.vmem %s3, %s204
        %p206 = pneg %p112
        %p207 = pneg %p109
        %p208 = pneg %p138
        %p209 = pneg %p135
        %s210 = sand.u32 %s125, 1
        %s211 = scalar_lea.sflag [#allocation3], %s210
        %s212 = sand.u32 %s125, 1
        %s213 = smul.addr %s212, 16
        %s214 = scalar_lea.vmem [#allocation2], %s213
        %p215 = scmp.lt.s32.totalorder %s18, 1
        %s216 = scalar_select %p215, %s18, 1
        %s217 = smul.addr %s216, 4
        %s218 = scalar_lea.vmem %s1, %s217
        %p219 = scmp.lt.s32.totalorder %s18, 1
        %s220 = scalar_select %p219, %s18, 1
        %s221 = smul.addr %s220, 8
        %s222 = scalar_lea.vmem %s2, %s221
        %p223 = scmp.lt.s32.totalorder %s18, 1
        %s224 = scalar_select %p223, %s18, 1
        %s225 = smul.addr %s224, 8
        %s226 = scalar_lea.vmem %s3, %s225
        %v228 = vld [vmem:[%s0] sm:$0xff]
        %s229 = scalar_lea.vmem %s0, 8
        %v230 = vld [vmem:[%s229] sm:$0xff]
        %v231 = vlaneseq
        %v232 = vand.u32 %v231, 127
        %233 = vrot.lane.b32.xlu0 %v228, 1
        %v234 = vpop.permute.xlu0 %233
        %235 = vrot.lane.b32.xlu0 %v230, 1
        %v236 = vpop.permute.xlu0 %235
        %vm237 = vcmp.lt.s32.totalorder %v232, 1
        %v238 = vsel %vm237, %v234, %v236
        %v239 = vsel %vm237, %v236, %v234
        %v240 = vadd.s32 %v232, 4294967295
        %vm241 = vcmp.ge.s32.totalorder %v240, 0
        %vm242 = vcmp.lt.s32.totalorder %v240, 128
        %vm243 = vmand %vm241, %vm242
        %v244 = vsel %vm243, %v239, 0.0
        %v245 = vsel %vm243, %v238, 0.0
        %v246 = vpack.c.bf16 %v244, %v244
        %v247 = vpack.c.bf16 %v245, %v245
        %v248 = vpack.c.bf16 %v228, %v228
        %v249 = vpack.c.bf16 %v230, %v230
        %250 = vrot.lane.b32.xlu0 %v228, 127
        %v251 = vpop.permute.xlu0 %250
        %252 = vrot.lane.b32.xlu0 %v230, 127
        %v253 = vpop.permute.xlu0 %252
        %vm254 = vcmp.lt.s32.totalorder %v232, 127
        %v255 = vsel %vm254, %v251, %v253
        %v256 = vsel %vm254, %v253, %v251
        %v257 = vadd.s32 %v232, 1
        %vm258 = vcmp.ge.s32.totalorder %v257, 0
        %vm259 = vcmp.lt.s32.totalorder %v257, 128
        %vm260 = vmand %vm258, %vm259
        %v261 = vsel %vm260, %v255, 0.0
        %v262 = vsel %vm260, %v256, 0.0
        %v263 = vpack.c.bf16 %v261, %v261
        %v264 = vpack.c.bf16 %v262, %v262
        %v267 = vrot.slane %v248, 4
        %v268 = vrot.slane %v249, 4
        %vm269 = vcmask 1043456
        %v272 = vsel %vm269, %v246, %v267
        %v276 = vsel %vm269, %v247, %v268
        %v278 = vld [vmem:[%s218] sm:$0xf]
        %vm279 = vcmask 195584
        %v281 = vsel %vm279, %v278, 0
        %v284 = vsel %vm269, %v263, 0
        %v287 = vsel %vm269, %v264, 0
        %289 = vmatprep.subr.bf16.mxu0 %v276
        %290 = vmatpush1.bf16.msra.mxu0 %v272
        %291 = vmatprep.subr.bf16.mxu0 %v287
        %292 = vmatpush1.bf16.msra.mxu0 %v284
        %293 = vmatprep.subr.bf16.mxu0 0
        %294 = vmatpush1.bf16.msra.mxu0 0
        %295 = vmatprep.subr.bf16.mxu0 0
        %296 = vmatpush1.bf16.msra.mxu0 0
        %297 = vmatprep.subr.bf16.mxu0 0
        %298 = vmatpush1.bf16.msra.mxu0 0
        %299 = vmatprep.subr.bf16.mxu0 0
        %300 = vmatpush1.bf16.msra.mxu0 0
        %301 = vmatprep.subr.bf16.mxu0 0
        %302 = vmatpush1.bf16.msra.mxu0 0
        %303 = vmatprep.subr.bf16.mxu0 0
        %304 = vmatpush1.bf16.msra.mxu0 0
        %305 = vmatprep.subr.bf16.mxu0 0
        %306 = vmatpush1.bf16.msra.mxu0 0
        %307 = vmatprep.subr.bf16.mxu0 0
        %308 = vmatpush1.bf16.msra.mxu0 0
        %309 = vmatprep.subr.bf16.mxu0 0
        %310 = vmatpush1.bf16.msra.mxu0 0
        %311 = vmatprep.subr.bf16.mxu0 0
        %312 = vmatpush1.bf16.msra.mxu0 0
        %313 = vmatprep.subr.bf16.mxu0 0
        %314 = vmatpush1.bf16.msra.mxu0 0
        %315 = vmatprep.subr.bf16.mxu0 0
        %316 = vmatpush1.bf16.msra.mxu0 0
        %317 = vmatprep.subr.bf16.mxu0 0
        %318 = vmatpush1.bf16.msra.mxu0 0
        %319 = vmatprep.subr.bf16.mxu0 0
        %320 = vmatpush1.bf16.msra.mxu0 0
        %321 = vmatprep.mubr.bf16.mxu0 0
        %322 = vmatmul.mubr.bf16.gmra.mrb[0].mxu0 %v281
        %v323 = vpop.f32.mrb[0].mxu0
        %v324 = vadd.f32 0.0, %v323
        %v325 = vpop.f32.mrb[0].mxu0
        %v326 = vadd.f32 0.0, %v325
        %v327 = vpop.f32.mrb[0].mxu0
        %v328 = vpop.f32.mrb[0].mxu0
        %329 = vdwg.mxu0
        %v330 = vmax.f32 %v324, 0.0
        %v331 = vmax.f32 %v326, 0.0
        %v332 = vadd.f32 %v330, %v331
        %333 = vadd.xlane.f32.xlu0 %v332
        %v334 = vpop.xlane.xlu0 %333
        %v335 = vmul.f32 %v334, 0.00390625
        %v336 = vmul.f32 %v330, %v330
        %v337 = vmul.f32 %v331, %v331
        %v338 = vadd.f32 %v336, %v337
        %339 = vadd.xlane.f32.xlu0 %v338
        %v340 = vpop.xlane.xlu0 %339
        %v341 = vmul.f32 %v340, 0.00390625
        %v342 = vmul.f32 %v335, %v335
        %v343 = vsub.f32 %v341, %v342
        %v344 = vld [vmem:[%s222] sm:$0xff]
        %v345 = vadd.f32 %v343, 1e-05
        %v346 = vrsqrt.pop %v345
        %v347 = vmul.f32 %v344, %v346
        %v348 = vld [vmem:[%s226] sm:$0xff]
        %v349 = vmul.f32 %v335, %v347
        %v350 = vsub.f32 %v348, %v349
        %352 = vset.pattern.permute.xlu0 0
        %353 = vperm.xlu0 %352, %v347
        %v354 = vpop.permute.xlu0 %353
        %v356 = vmul.f32 %v330, %v354
        %v357 = vmul.f32 %v331, %v354
        %359 = vset.pattern.permute.xlu0 0
        %360 = vperm.xlu0 %359, %v350
        %v361 = vpop.permute.xlu0 %360
        %v363 = vadd.f32 %v356, %v361
        %v364 = vadd.f32 %v357, %v361
        %365 = vst [vmem:[%s214] sm:$0xff] %v363
        %s366 = scalar_lea.vmem %s214, 8 [#allocation2]
        %367 = vst [vmem:[%s366] sm:$0xff] %v364
        %s368 = sand.u32 %s125, 1
        %s369 = scalar_lea.sflag [#allocation3], %s368
        %s370 = sand.u32 %s125, 1
        %s371 = smul.addr %s370, 16
        %s372 = scalar_lea.vmem [#allocation2], %s371
        // Predicated region
        $region37: #{tpu_custom_call.1} parent=35 // pred_check
          %p373 = pneg %p135
        $region38: #{tpu_custom_call.1} parent=35 // pred_check_branch
          %375 = sbr.rel (%p373) target = $region40
        $region39: #{tpu_custom_call.1} parent=35 // pred_region
          %s377 = ssub.s32 256, 256
          %378 = vsyncadd %s369, %s377
          %s379 = smul.addr %s18, 128
          %s380 = scalar_lea.hbm %s4, %s379
          %s381 = sshll.u32 %s372, 4
          %s382 = int_to_ptr.vmem [resolvable:$true] %s381
          %387 = dma.vmem_to_hbm [thread:$0]  %s382, 256, %s380, %s369, 128, 256, 8
        $region40: #{tpu_custom_call.1} parent=35 // pred_fallthru
          _
      $region36: #{tpu_custom_call.1} parent=5 // pred_fallthru
        _
      %p388 = scmp.le.s32.totalorder 2, %s13
      // Predicated region
      $region41: #{tpu_custom_call.1} parent=5 // pred_check
        %p389 = pneg %p388
      $region42: #{tpu_custom_call.1} parent=5 // pred_check_branch
        %391 = sbr.rel (%p389) target = $region44
      $region43: #{tpu_custom_call.1} parent=5 // pred_region
        %s392 = ssub.s32 %s13, 2
        // Predicated region
        $region45: #{tpu_custom_call.1} parent=43 // pred_check
          %p393 = pneg %p141
        $region46: #{tpu_custom_call.1} parent=43 // pred_check_branch
          %395 = sbr.rel (%p393) target = $region48
        $region47: #{tpu_custom_call.1} parent=43 // pred_region
          %s396 = sand.u32 %s126, 1
          %s397 = scalar_lea.sflag [#allocation3], %s396
          %s398 = sand.u32 %s126, 1
          %s399 = smul.addr %s398, 16
          %s400 = scalar_lea.vmem [#allocation2], %s399
          %401 = dma.done %s397, 256
        $region48: #{tpu_custom_call.1} parent=43 // pred_fallthru
          _
      $region44: #{tpu_custom_call.1} parent=5 // pred_fallthru
        _
    $region6: #{tpu_custom_call.1} parent=1 // loop_footer
      %s17 = sadd.s32 1, %s13
    $region7: #{tpu_custom_call.1} parent=1 // loop_footer_branch
      %12 = sbr.rel target = $region3
    $region8: #{tpu_custom_call.1} parent=1 // loop_exit
      _
    %402 = vsyncpa [#allocation3], 1
    %s403 = scalar_lea.sflag [#allocation3], 1
    %404 = vsyncpa %s403, 1

</llo_original>
